<compile_context>
chip_gen: v7x
topology: tpu7x:2x2x1
jax: 0.10.0
libtpu: 0.0.40
codegen_flags: <defaults>
</compile_context>

<pallas_src>
import jax
import jax.numpy as jnp
from jax.experimental import pallas as pl
from jax.experimental.pallas import tpu as pltpu


def _double_well_kernel(h_ref, x_ref, o_ref):
    # h_ref: (1,1) f32 scalar in SMEM
    # x_ref: (tb, n) input block in VMEM (native dtype, native layout)
    # o_ref: (tb, 1) f32 per-row energies
    x = x_ref[...]
    if x.dtype != jnp.float32:
        x = x.astype(jnp.float32)                     # in-register upcast (VPU)
    t = x * x - 1.0                                   # VPU
    # NOTE: keep (x^2-1)^2 un-expanded; x^4-2x^2+1 cancels badly near |x|~1.
    e = jnp.sum(t * t, axis=-1, keepdims=True)        # cross-lane reduce -> XLU
    o_ref[...] = (h_ref[0, 0] * e).astype(o_ref.dtype)


def _round_up(v, m):
    return ((v + m - 1) // m) * m


def _choose_rows(batch, n, itemsize):
    """Pick the per-step row-tile size by VMEM footprint, not raw data bytes."""
    n_pad = _round_up(max(n, 1), 128)                 # minor dim is lane-padded in VMEM
    per_row_bytes = n_pad * itemsize + 128 * 4        # input row + (pessimistic) output row
    target_bytes = 8 * 1024 * 1024                    # ~8 MiB / grid step
    rows = max(8, ((target_bytes // per_row_bytes) // 8) * 8)
    if rows >= batch:
        return batch, 1                               # single block == full array dims
    return rows, pl.cdiv(batch, rows)                 # last block may be partial (rows independent)


def double_well_energy(x, barrier_height=2.0):
    """E(x) = h * sum((x^2 - 1)^2, -1) per sample, as a single-pass Pallas TPU kernel.

    Matches DoubleWellEnergy.forward: x of shape (batch, n) (or (n,), promoted
    to (1, n)); returns shape (batch,) float32 energies.
    """
    x = jnp.asarray(x)
    if x.ndim == 1:
        x = x[None, :]
    batch, n = x.shape

    tb, grid_b = _choose_rows(batch, n, x.dtype.itemsize)

    # Runtime scalar -> no recompile per barrier_height value.
    h = jnp.full((1, 1), barrier_height, dtype=jnp.float32)

    # Explicit VMEM budget: 2x double-buffered (input block + output block) + slack.
    n_pad = _round_up(max(n, 1), 128)
    block_bytes = tb * n_pad * x.dtype.itemsize + tb * 128 * 4
    vmem_bytes = int(min(30 * 1024 * 1024,
                         max(4 * 1024 * 1024, 2 * block_bytes + (1 << 20))))

    out = pl.pallas_call(
        _double_well_kernel,
        out_shape=jax.ShapeDtypeStruct((batch, 1), jnp.float32),
        grid_spec=pltpu.PrefetchScalarGridSpec(
            num_scalar_prefetch=0,
            grid=(grid_b,),
            in_specs=[
                pl.BlockSpec(memory_space=pltpu.MemorySpace.SMEM),   # barrier height
                pl.BlockSpec((tb, n), lambda i: (i, 0)),             # x, native layout
            ],
            out_specs=pl.BlockSpec((tb, 1), lambda i: (i, 0)),
        ),
        compiler_params=pltpu.CompilerParams(
            dimension_semantics=("parallel",),   # lets v7x shard row-tiles across its 2 TCs
            vmem_limit_bytes=vmem_bytes,
        ),
    )(h, x)

    return out[:, 0]  # (batch,)


def double_well_energy_ref(x, barrier_height=2.0):
    """Pure-JAX reference matching the PyTorch forward exactly."""
    x = jnp.asarray(x, dtype=jnp.float32)
    if x.ndim == 1:
        x = x[None, :]
    return barrier_height * jnp.sum((x ** 2 - 1.0) ** 2, axis=-1)


if __name__ == "__main__":
    key = jax.random.PRNGKey(0)

    # 2-D batch case
    batch, n = 256, 32
    x = jax.random.normal(key, (batch, n), dtype=jnp.float32) * 1.5
    energy = jax.block_until_ready(double_well_energy(x, barrier_height=2.0))
    ref = double_well_energy_ref(x, barrier_height=2.0)
    assert energy.shape == (batch,), energy.shape
    assert jnp.allclose(energy, ref, atol=1e-4, rtol=1e-5), (energy, ref)

    # 1-D input promotion case (and a different barrier height, same compile path)
    x1 = jax.random.normal(jax.random.PRNGKey(1), (n,), dtype=jnp.float32)
    e1 = jax.block_until_ready(double_well_energy(x1, barrier_height=0.5))
    r1 = double_well_energy_ref(x1, barrier_height=0.5)
    assert e1.shape == (1,), e1.shape
    assert jnp.allclose(e1, r1, atol=1e-4, rtol=1e-5), (e1, r1)

    print("KERNEL_OK")
</pallas_src>

<mosaic_0001>
module attributes {stable_mosaic.version = 11 : i64} {
  func.func @_double_well_kernel(%arg0: i32, %arg1: memref<1x1xf32, #tpu.memory_space<smem>>, %arg2: memref<256x32xf32, #tpu.memory_space<vmem>>, %arg3: memref<256x1xf32, #tpu.memory_space<vmem>>) attributes {dimension_semantics = [#tpu.dimension_semantics<parallel>], iteration_bounds = array<i64: 1>, scalar_prefetch = 0 : i64, scratch_operands = 0 : i64, tpu.core_type = #tpu.core_type<tc>, window_params = [{transform_indices = @transform_0, window_bounds = array<i64: 1, 1>}, {transform_indices = @transform_1, window_bounds = array<i64: 256, 32>}, {transform_indices = @transform_2, window_bounds = array<i64: 256, 1>}]} {
    %c0 = arith.constant 0 : index
    %c0_0 = arith.constant 0 : index
    %0 = vector.load %arg2[%c0, %c0_0] : memref<256x32xf32, #tpu.memory_space<vmem>>, vector<256x32xf32>
    %1 = arith.mulf %0, %0 : vector<256x32xf32>
    %cst = arith.constant 1.000000e+00 : f32
    %2 = vector.broadcast %cst : f32 to vector<256x32xf32>
    %3 = arith.subf %1, %2 : vector<256x32xf32>
    %4 = arith.mulf %3, %3 : vector<256x32xf32>
    %cst_1 = arith.constant dense<0.000000e+00> : vector<256xf32>
    %5 = vector.multi_reduction <add>, %4, %cst_1 [1] : vector<256x32xf32> to vector<256xf32>
    %6 = vector.shape_cast %5 : vector<256xf32> to vector<256x1xf32>
    %c0_2 = arith.constant 0 : index
    %c0_3 = arith.constant 0 : index
    %7 = memref.load %arg1[%c0_2, %c0_3] : memref<1x1xf32, #tpu.memory_space<smem>>
    %8 = vector.broadcast %7 : f32 to vector<256x1xf32>
    %9 = arith.mulf %8, %6 : vector<256x1xf32>
    %c0_4 = arith.constant 0 : index
    %c0_5 = arith.constant 0 : index
    %10 = vector.load %arg3[%c0_4, %c0_5] : memref<256x1xf32, #tpu.memory_space<vmem>>, vector<256x1xf32>
    tpu.vector_store %arg3[%c0_4, %c0_5], %9 {strides = array<i32>} : memref<256x1xf32, #tpu.memory_space<vmem>>, vector<256x1xf32>,
    return
  }
  func.func @transform_0(%arg0: i32) -> (i32, i32) {
    %c0_i32 = arith.constant 0 : i32
    %c0_i32_0 = arith.constant 0 : i32
    %c0_i32_1 = arith.constant 0 : i32
    return %c0_i32, %c0_i32_0 : i32, i32
  }
  func.func @transform_1(%arg0: i32) -> (i32, i32) {
    %c0_i32 = arith.constant 0 : i32
    %c0_i32_0 = arith.constant 0 : i32
    return %arg0, %c0_i32 : i32, i32
  }
  func.func @transform_2(%arg0: i32) -> (i32, i32) {
    %c0_i32 = arith.constant 0 : i32
    %c0_i32_0 = arith.constant 0 : i32
    return %arg0, %c0_i32 : i32, i32
  }
}

</mosaic_0001>

<llo_original>
// kernel: tpu_custom_call.1
$region0: #{tpu_custom_call.1}
  #allocation0 [shape = 'u32[]', space=smem, size = 0x4, offset = 0x4, fixed_abs, tag = 'smem constant byte address 0x4 - core index']
  #allocation1 [shape = 'u32[144,128]{1,0:T(1,128)}', space=vmem, size = 0x12000, scoped, tag = 'internal scratch']
  #allocation2 [shape = 'f32[1,1]{1,0:T(1,128)S(6)}', space=smem, size = 0x200, scoped, tag = 'scoped memory for tpu_custom_call.1']
  %s0 = inlined_call_operand.<no memory space> [shape: f32[1,1], index: 0, kind: input, shape index: {}]
  %s1 = inlined_call_operand.vmem [shape: f32[256,32], index: 1, kind: input, shape index: {}]
  %s2 = inlined_call_operand.vmem [shape: f32[256,1], index: 2, kind: output, shape index: {}]
  %s3 = sld [smem:[#allocation0]]
  $region18: #{tpu_custom_call.1} parent=0
    _
  %s5 = ssub.s32 1, %s3
  %s6 = scalar_select 0, %s5, %s3
  %7 = sst [smem:[#allocation2]] %s0
  // Predicated region
  $region2: #{tpu_custom_call.1} parent=0 // pred_check
    _
  $region3: #{tpu_custom_call.1} parent=0 // pred_check_branch
    %9 = sbr.rel (0) target = $region5
  $region4: #{tpu_custom_call.1} parent=0 // pred_region
    _
  $region5: #{tpu_custom_call.1} parent=0 // pred_fallthru
    _
  // Predicated region
  $region6: #{tpu_custom_call.1} parent=0 // pred_check
    _
  $region7: #{tpu_custom_call.1} parent=0 // pred_check_branch
    %11 = sbr.rel (0) target = $region9
  $region8: #{tpu_custom_call.1} parent=0 // pred_region
    _
  $region9: #{tpu_custom_call.1} parent=0 // pred_fallthru
    _
  %v12 = vld [vmem:[%s1] sm:$0xff]
  %v13 = vld [vmem:[%s1 + $0x8] sm:$0xff]
  %v14 = vld [vmem:[%s1 + $0x10] sm:$0xff]
  %v15 = vld [vmem:[%s1 + $0x18] sm:$0xff]
  %v16 = vld [vmem:[%s1 + $0x20] sm:$0xff]
  %v17 = vld [vmem:[%s1 + $0x28] sm:$0xff]
  %v18 = vld [vmem:[%s1 + $0x30] sm:$0xff]
  %v19 = vld [vmem:[%s1 + $0x38] sm:$0xff]
  %v20 = vld [vmem:[%s1 + $0x40] sm:$0xff]
  %v21 = vld [vmem:[%s1 + $0x48] sm:$0xff]
  %v22 = vld [vmem:[%s1 + $0x50] sm:$0xff]
  %v23 = vld [vmem:[%s1 + $0x58] sm:$0xff]
  %v24 = vld [vmem:[%s1 + $0x60] sm:$0xff]
  %v25 = vld [vmem:[%s1 + $0x68] sm:$0xff]
  %v26 = vld [vmem:[%s1 + $0x70] sm:$0xff]
  %v27 = vld [vmem:[%s1 + $0x78] sm:$0xff]
  %v28 = vld [vmem:[%s1 + $0x80] sm:$0xff]
  %v29 = vld [vmem:[%s1 + $0x88] sm:$0xff]
  %v30 = vld [vmem:[%s1 + $0x90] sm:$0xff]
  %v31 = vld [vmem:[%s1 + $0x98] sm:$0xff]
  %v32 = vld [vmem:[%s1 + $0xa0] sm:$0xff]
  %v33 = vld [vmem:[%s1 + $0xa8] sm:$0xff]
  %v34 = vld [vmem:[%s1 + $0xb0] sm:$0xff]
  %v35 = vld [vmem:[%s1 + $0xb8] sm:$0xff]
  %v36 = vld [vmem:[%s1 + $0xc0] sm:$0xff]
  %v37 = vld [vmem:[%s1 + $0xc8] sm:$0xff]
  %v38 = vld [vmem:[%s1 + $0xd0] sm:$0xff]
  %v39 = vld [vmem:[%s1 + $0xd8] sm:$0xff]
  %v40 = vld [vmem:[%s1 + $0xe0] sm:$0xff]
  %v41 = vld [vmem:[%s1 + $0xe8] sm:$0xff]
  %v42 = vld [vmem:[%s1 + $0xf0] sm:$0xff]
  %v43 = vld [vmem:[%s1 + $0xf8] sm:$0xff]
  %v44 = vmul.f32 %v12, %v12
  %v45 = vmul.f32 %v13, %v13
  %v46 = vmul.f32 %v14, %v14
  %v47 = vmul.f32 %v15, %v15
  %v48 = vmul.f32 %v16, %v16
  %v49 = vmul.f32 %v17, %v17
  %v50 = vmul.f32 %v18, %v18
  %v51 = vmul.f32 %v19, %v19
  %v52 = vmul.f32 %v20, %v20
  %v53 = vmul.f32 %v21, %v21
  %v54 = vmul.f32 %v22, %v22
  %v55 = vmul.f32 %v23, %v23
  %v56 = vmul.f32 %v24, %v24
  %v57 = vmul.f32 %v25, %v25
  %v58 = vmul.f32 %v26, %v26
  %v59 = vmul.f32 %v27, %v27
  %v60 = vmul.f32 %v28, %v28
  %v61 = vmul.f32 %v29, %v29
  %v62 = vmul.f32 %v30, %v30
  %v63 = vmul.f32 %v31, %v31
  %v64 = vmul.f32 %v32, %v32
  %v65 = vmul.f32 %v33, %v33
  %v66 = vmul.f32 %v34, %v34
  %v67 = vmul.f32 %v35, %v35
  %v68 = vmul.f32 %v36, %v36
  %v69 = vmul.f32 %v37, %v37
  %v70 = vmul.f32 %v38, %v38
  %v71 = vmul.f32 %v39, %v39
  %v72 = vmul.f32 %v40, %v40
  %v73 = vmul.f32 %v41, %v41
  %v74 = vmul.f32 %v42, %v42
  %v75 = vmul.f32 %v43, %v43
  %v76 = vsub.f32 %v44, 1.0
  %v77 = vsub.f32 %v45, 1.0
  %v78 = vsub.f32 %v46, 1.0
  %v79 = vsub.f32 %v47, 1.0
  %v80 = vsub.f32 %v48, 1.0
  %v81 = vsub.f32 %v49, 1.0
  %v82 = vsub.f32 %v50, 1.0
  %v83 = vsub.f32 %v51, 1.0
  %v84 = vsub.f32 %v52, 1.0
  %v85 = vsub.f32 %v53, 1.0
  %v86 = vsub.f32 %v54, 1.0
  %v87 = vsub.f32 %v55, 1.0
  %v88 = vsub.f32 %v56, 1.0
  %v89 = vsub.f32 %v57, 1.0
  %v90 = vsub.f32 %v58, 1.0
  %v91 = vsub.f32 %v59, 1.0
  %v92 = vsub.f32 %v60, 1.0
  %v93 = vsub.f32 %v61, 1.0
  %v94 = vsub.f32 %v62, 1.0
  %v95 = vsub.f32 %v63, 1.0
  %v96 = vsub.f32 %v64, 1.0
  %v97 = vsub.f32 %v65, 1.0
  %v98 = vsub.f32 %v66, 1.0
  %v99 = vsub.f32 %v67, 1.0
  %v100 = vsub.f32 %v68, 1.0
  %v101 = vsub.f32 %v69, 1.0
  %v102 = vsub.f32 %v70, 1.0
  %v103 = vsub.f32 %v71, 1.0
  %v104 = vsub.f32 %v72, 1.0
  %v105 = vsub.f32 %v73, 1.0
  %v106 = vsub.f32 %v74, 1.0
  %v107 = vsub.f32 %v75, 1.0
  %v108 = vmul.f32 %v76, %v76
  %v109 = vmul.f32 %v77, %v77
  %v110 = vmul.f32 %v78, %v78
  %v111 = vmul.f32 %v79, %v79
  %v112 = vmul.f32 %v80, %v80
  %v113 = vmul.f32 %v81, %v81
  %v114 = vmul.f32 %v82, %v82
  %v115 = vmul.f32 %v83, %v83
  %v116 = vmul.f32 %v84, %v84
  %v117 = vmul.f32 %v85, %v85
  %v118 = vmul.f32 %v86, %v86
  %v119 = vmul.f32 %v87, %v87
  %v120 = vmul.f32 %v88, %v88
  %v121 = vmul.f32 %v89, %v89
  %v122 = vmul.f32 %v90, %v90
  %v123 = vmul.f32 %v91, %v91
  %v124 = vmul.f32 %v92, %v92
  %v125 = vmul.f32 %v93, %v93
  %v126 = vmul.f32 %v94, %v94
  %v127 = vmul.f32 %v95, %v95
  %v128 = vmul.f32 %v96, %v96
  %v129 = vmul.f32 %v97, %v97
  %v130 = vmul.f32 %v98, %v98
  %v131 = vmul.f32 %v99, %v99
  %v132 = vmul.f32 %v100, %v100
  %v133 = vmul.f32 %v101, %v101
  %v134 = vmul.f32 %v102, %v102
  %v135 = vmul.f32 %v103, %v103
  %v136 = vmul.f32 %v104, %v104
  %v137 = vmul.f32 %v105, %v105
  %v138 = vmul.f32 %v106, %v106
  %v139 = vmul.f32 %v107, %v107
  %vm140 = vcmask 261120
  %v141 = vsel %vm140, %v108, 0.0
  %142 = vadd.xlane.f32.xlu0 %v141
  %v143 = vpop.xlane.xlu0 %142
  %v144 = vsel %vm140, %v109, 0.0
  %145 = vadd.xlane.f32.xlu0 %v144
  %v146 = vpop.xlane.xlu0 %145
  %v147 = vsel %vm140, %v110, 0.0
  %148 = vadd.xlane.f32.xlu0 %v147
  %v149 = vpop.xlane.xlu0 %148
  %v150 = vsel %vm140, %v111, 0.0
  %151 = vadd.xlane.f32.xlu0 %v150
  %v152 = vpop.xlane.xlu0 %151
  %v153 = vsel %vm140, %v112, 0.0
  %154 = vadd.xlane.f32.xlu0 %v153
  %v155 = vpop.xlane.xlu0 %154
  %v156 = vsel %vm140, %v113, 0.0
  %157 = vadd.xlane.f32.xlu0 %v156
  %v158 = vpop.xlane.xlu0 %157
  %v159 = vsel %vm140, %v114, 0.0
  %160 = vadd.xlane.f32.xlu0 %v159
  %v161 = vpop.xlane.xlu0 %160
  %v162 = vsel %vm140, %v115, 0.0
  %163 = vadd.xlane.f32.xlu0 %v162
  %v164 = vpop.xlane.xlu0 %163
  %v165 = vsel %vm140, %v116, 0.0
  %166 = vadd.xlane.f32.xlu0 %v165
  %v167 = vpop.xlane.xlu0 %166
  %v168 = vsel %vm140, %v117, 0.0
  %169 = vadd.xlane.f32.xlu0 %v168
  %v170 = vpop.xlane.xlu0 %169
  %v171 = vsel %vm140, %v118, 0.0
  %172 = vadd.xlane.f32.xlu0 %v171
  %v173 = vpop.xlane.xlu0 %172
  %v174 = vsel %vm140, %v119, 0.0
  %175 = vadd.xlane.f32.xlu0 %v174
  %v176 = vpop.xlane.xlu0 %175
  %v177 = vsel %vm140, %v120, 0.0
  %178 = vadd.xlane.f32.xlu0 %v177
  %v179 = vpop.xlane.xlu0 %178
  %v180 = vsel %vm140, %v121, 0.0
  %181 = vadd.xlane.f32.xlu0 %v180
  %v182 = vpop.xlane.xlu0 %181
  %v183 = vsel %vm140, %v122, 0.0
  %184 = vadd.xlane.f32.xlu0 %v183
  %v185 = vpop.xlane.xlu0 %184
  %v186 = vsel %vm140, %v123, 0.0
  %187 = vadd.xlane.f32.xlu0 %v186
  %v188 = vpop.xlane.xlu0 %187
  %v189 = vsel %vm140, %v124, 0.0
  %190 = vadd.xlane.f32.xlu0 %v189
  %v191 = vpop.xlane.xlu0 %190
  %v192 = vsel %vm140, %v125, 0.0
  %193 = vadd.xlane.f32.xlu0 %v192
  %v194 = vpop.xlane.xlu0 %193
  %v195 = vsel %vm140, %v126, 0.0
  %196 = vadd.xlane.f32.xlu0 %v195
  %v197 = vpop.xlane.xlu0 %196
  %v198 = vsel %vm140, %v127, 0.0
  %199 = vadd.xlane.f32.xlu0 %v198
  %v200 = vpop.xlane.xlu0 %199
  %v201 = vsel %vm140, %v128, 0.0
  %202 = vadd.xlane.f32.xlu0 %v201
  %v203 = vpop.xlane.xlu0 %202
  %v204 = vsel %vm140, %v129, 0.0
  %205 = vadd.xlane.f32.xlu0 %v204
  %v206 = vpop.xlane.xlu0 %205
  %v207 = vsel %vm140, %v130, 0.0
  %208 = vadd.xlane.f32.xlu0 %v207
  %v209 = vpop.xlane.xlu0 %208
  %v210 = vsel %vm140, %v131, 0.0
  %211 = vadd.xlane.f32.xlu0 %v210
  %v212 = vpop.xlane.xlu0 %211
  %v213 = vsel %vm140, %v132, 0.0
  %214 = vadd.xlane.f32.xlu0 %v213
  %v215 = vpop.xlane.xlu0 %214
  %v216 = vsel %vm140, %v133, 0.0
  %217 = vadd.xlane.f32.xlu0 %v216
  %v218 = vpop.xlane.xlu0 %217
  %v219 = vsel %vm140, %v134, 0.0
  %220 = vadd.xlane.f32.xlu0 %v219
  %v221 = vpop.xlane.xlu0 %220
  %v222 = vsel %vm140, %v135, 0.0
  %223 = vadd.xlane.f32.xlu0 %v222
  %v224 = vpop.xlane.xlu0 %223
  %v225 = vsel %vm140, %v136, 0.0
  %226 = vadd.xlane.f32.xlu0 %v225
  %v227 = vpop.xlane.xlu0 %226
  %v228 = vsel %vm140, %v137, 0.0
  %229 = vadd.xlane.f32.xlu0 %v228
  %v230 = vpop.xlane.xlu0 %229
  %v231 = vsel %vm140, %v138, 0.0
  %232 = vadd.xlane.f32.xlu0 %v231
  %v233 = vpop.xlane.xlu0 %232
  %v234 = vsel %vm140, %v139, 0.0
  %235 = vadd.xlane.f32.xlu0 %v234
  %v236 = vpop.xlane.xlu0 %235
  %s237 = sld [smem:[#allocation2]]
  %v238 = vstv %s237
  %v239 = vmul.f32 %v238, %v143
  %v240 = vmul.f32 %v238, %v146
  %v241 = vmul.f32 %v238, %v149
  %v242 = vmul.f32 %v238, %v152
  %v243 = vmul.f32 %v238, %v155
  %v244 = vmul.f32 %v238, %v158
  %v245 = vmul.f32 %v238, %v161
  %v246 = vmul.f32 %v238, %v164
  %v247 = vmul.f32 %v238, %v167
  %v248 = vmul.f32 %v238, %v170
  %v249 = vmul.f32 %v238, %v173
  %v250 = vmul.f32 %v238, %v176
  %v251 = vmul.f32 %v238, %v179
  %v252 = vmul.f32 %v238, %v182
  %v253 = vmul.f32 %v238, %v185
  %v254 = vmul.f32 %v238, %v188
  %v255 = vmul.f32 %v238, %v191
  %v256 = vmul.f32 %v238, %v194
  %v257 = vmul.f32 %v238, %v197
  %v258 = vmul.f32 %v238, %v200
  %v259 = vmul.f32 %v238, %v203
  %v260 = vmul.f32 %v238, %v206
  %v261 = vmul.f32 %v238, %v209
  %v262 = vmul.f32 %v238, %v212
  %v263 = vmul.f32 %v238, %v215
  %v264 = vmul.f32 %v238, %v218
  %v265 = vmul.f32 %v238, %v221
  %v266 = vmul.f32 %v238, %v224
  %v267 = vmul.f32 %v238, %v227
  %v268 = vmul.f32 %v238, %v230
  %v269 = vmul.f32 %v238, %v233
  %v270 = vmul.f32 %v238, %v236
  %vm271 = vcmask 7168
  %272 = vst.msk [vmem:[%s2] sm:$0xff] %vm271, %v239
  %273 = vst.msk [vmem:[%s2 + $0x8] sm:$0xff] %vm271, %v240
  %274 = vst.msk [vmem:[%s2 + $0x10] sm:$0xff] %vm271, %v241
  %275 = vst.msk [vmem:[%s2 + $0x18] sm:$0xff] %vm271, %v242
  %276 = vst.msk [vmem:[%s2 + $0x20] sm:$0xff] %vm271, %v243
  %277 = vst.msk [vmem:[%s2 + $0x28] sm:$0xff] %vm271, %v244
  %278 = vst.msk [vmem:[%s2 + $0x30] sm:$0xff] %vm271, %v245
  %279 = vst.msk [vmem:[%s2 + $0x38] sm:$0xff] %vm271, %v246
  %280 = vst.msk [vmem:[%s2 + $0x40] sm:$0xff] %vm271, %v247
  %281 = vst.msk [vmem:[%s2 + $0x48] sm:$0xff] %vm271, %v248
  %282 = vst.msk [vmem:[%s2 + $0x50] sm:$0xff] %vm271, %v249
  %283 = vst.msk [vmem:[%s2 + $0x58] sm:$0xff] %vm271, %v250
  %284 = vst.msk [vmem:[%s2 + $0x60] sm:$0xff] %vm271, %v251
  %285 = vst.msk [vmem:[%s2 + $0x68] sm:$0xff] %vm271, %v252
  %286 = vst.msk [vmem:[%s2 + $0x70] sm:$0xff] %vm271, %v253
  %287 = vst.msk [vmem:[%s2 + $0x78] sm:$0xff] %vm271, %v254
  %288 = vst.msk [vmem:[%s2 + $0x80] sm:$0xff] %vm271, %v255
  %289 = vst.msk [vmem:[%s2 + $0x88] sm:$0xff] %vm271, %v256
  %290 = vst.msk [vmem:[%s2 + $0x90] sm:$0xff] %vm271, %v257
  %291 = vst.msk [vmem:[%s2 + $0x98] sm:$0xff] %vm271, %v258
  %292 = vst.msk [vmem:[%s2 + $0xa0] sm:$0xff] %vm271, %v259
  %293 = vst.msk [vmem:[%s2 + $0xa8] sm:$0xff] %vm271, %v260
  %294 = vst.msk [vmem:[%s2 + $0xb0] sm:$0xff] %vm271, %v261
  %295 = vst.msk [vmem:[%s2 + $0xb8] sm:$0xff] %vm271, %v262
  %296 = vst.msk [vmem:[%s2 + $0xc0] sm:$0xff] %vm271, %v263
  %297 = vst.msk [vmem:[%s2 + $0xc8] sm:$0xff] %vm271, %v264
  %298 = vst.msk [vmem:[%s2 + $0xd0] sm:$0xff] %vm271, %v265
  %299 = vst.msk [vmem:[%s2 + $0xd8] sm:$0xff] %vm271, %v266
  %300 = vst.msk [vmem:[%s2 + $0xe0] sm:$0xff] %vm271, %v267
  %301 = vst.msk [vmem:[%s2 + $0xe8] sm:$0xff] %vm271, %v268
  %302 = vst.msk [vmem:[%s2 + $0xf0] sm:$0xff] %vm271, %v269
  %303 = vst.msk [vmem:[%s2 + $0xf8] sm:$0xff] %vm271, %v270
  // Predicated region
  $region10: #{tpu_custom_call.1} parent=0 // pred_check
    _
  $region11: #{tpu_custom_call.1} parent=0 // pred_check_branch
    %305 = sbr.rel (0) target = $region13
  $region12: #{tpu_custom_call.1} parent=0 // pred_region
    _
  $region13: #{tpu_custom_call.1} parent=0 // pred_fallthru
    _
  // Predicated region
  $region14: #{tpu_custom_call.1} parent=0 // pred_check
    _
  $region15: #{tpu_custom_call.1} parent=0 // pred_check_branch
    %307 = sbr.rel (0) target = $region17
  $region16: #{tpu_custom_call.1} parent=0 // pred_region
    _
  $region17: #{tpu_custom_call.1} parent=0 // pred_fallthru
    _

</llo_original>
